<compile_context>
chip_gen: v7x
topology: tpu7x:2x2x1
jax: 0.10.0
libtpu: 0.0.40
codegen_flags: <defaults>
</compile_context>

<pallas_src>
import functools
import math

import jax
import jax.numpy as jnp
from jax.experimental import pallas as pl
from jax.experimental.pallas import tpu as pltpu


def _round_up(x, m):
    return ((x + m - 1) // m) * m


def _pick_batch_block(n, c_in, hw, itemsize):
    """Sublane-dense (multiple-of-8) batch tile, ~1 MiB per block, >=2 grid steps when possible."""
    bytes_per_row = max(1, c_in * hw * itemsize)
    bb = max(8, (1 << 20) // bytes_per_row)      # ~1 MiB blocks amortize ~0.35us/step overhead
    bb = (bb // 8) * 8                           # f32: 8 rows per sublane group
    bb = min(bb, _round_up(max(n, 1), 8))        # never pad the batch by more than one group
    if n > 8:
        # >=2 grid steps: DMA/compute overlap + v7x 2-TensorCore sharding of the batch axis.
        bb = min(bb, _round_up((n + 1) // 2, 8))
    return max(8, bb)


def _lse_pool_kernel(w_ref, b_ref, x_ref, o_ref, *, c_in, hw, inv_r):
    # w_ref: SMEM (K, C_in) f32, pre-scaled by r.   b_ref: SMEM (K,) f32, bias + log(1/HW)/r.
    # x_ref: VMEM (bn, C_in*HW).                    o_ref: VMEM (bn, K).
    n_classes = o_ref.shape[-1]

    # Hoist channel loads/casts out of the class loop: each (bn, hw) channel slab is read
    # from VMEM and cast once, then reused for all K classes (static, lane-aligned slices).
    xc = [x_ref[:, pl.ds(c * hw, hw)].astype(jnp.float32) for c in range(c_in)]

    cols = []
    for k_i in range(n_classes):
        # 1x1 conv for class k_i with r pre-folded into the weights:
        #   y = r * sum_c w[k_i, c] * x[:, c, :]
        # scalar * lane-dense VPU FMAs; the MXU would be >96% padding at these channel counts.
        y = w_ref[k_i, 0] * xc[0]
        for c in range(1, c_in):
            y = y + w_ref[k_i, c] * xc[c]

        # Numerically-stable LSE over HW: lane-axis max/sum on the XLU, exp/log on the EUP.
        m = jnp.max(y, axis=-1, keepdims=True)                  # (bn, 1)
        s = jnp.sum(jnp.exp(y - m), axis=-1, keepdims=True)     # (bn, 1)
        # bias (and log(1/HW)/r) folded in post-pool via LSE shift invariance.
        cols.append((jnp.log(s) + m) * inv_r + b_ref[k_i])

    o_ref[...] = jnp.concatenate(cols, axis=-1).astype(o_ref.dtype)   # single (bn, K) store


def logsumexp_pool(x_nchw, weight, bias, *, r=10.0, batch_block=None):
    """x_nchw: [N, C_in, H, W]; weight: [K, C_in, 1, 1]; bias: [K] -> logits [N, K]."""
    n, c_in, h, w = x_nchw.shape
    k = weight.shape[0]
    hw = h * w
    itemsize = jnp.dtype(x_nchw.dtype).itemsize

    # Fold r into the conv weights and (bias + log(1/HW)/r) into a post-pool constant:
    #   (1/r)*log(mean_hw exp(r*(w.x + b - max))) + max
    #     == (log(sum exp(r*w.x - m)) + m)/r + b + log(1/HW)/r,   m = max_hw(r*w.x).
    w_mat = float(r) * weight.reshape(k, c_in).astype(jnp.float32)
    b_vec = bias.reshape(k).astype(jnp.float32) + jnp.float32(math.log(1.0 / hw) / float(r))

    if batch_block is None:
        batch_block = _pick_batch_block(n, c_in, hw, itemsize)
    batch_block = max(1, int(batch_block))

    # Pad the batch so it tiles exactly (zero rows are harmless through the LSE); keeps the
    # sublane-dense block shape without a remainder path.  Pure reshape: HW stays lane-major.
    n_total = _round_up(max(n, 1), batch_block)
    x = x_nchw.reshape(n, c_in * hw)
    if n_total != n:
        x = jnp.concatenate([x, jnp.zeros((n_total - n, c_in * hw), x.dtype)], axis=0)

    grid = (n_total // batch_block,)
    block_bytes = batch_block * c_in * hw * itemsize
    vmem_limit = None
    if 3 * block_bytes > (12 << 20):
        # Large blocks: raise scoped VMEM (v5e default is only 16 MiB) but stay under
        # v7x's 64 MiB physical VMEM.
        vmem_limit = int(min(64 << 20, max(32 << 20, 4 * block_bytes)))

    kernel = functools.partial(_lse_pool_kernel, c_in=c_in, hw=hw, inv_r=1.0 / float(r))

    out = pl.pallas_call(
        kernel,
        out_shape=jax.ShapeDtypeStruct((n_total, k), x_nchw.dtype),
        grid_spec=pltpu.PrefetchScalarGridSpec(
            num_scalar_prefetch=0,
            grid=grid,
            in_specs=[
                # Tiny weight / bias tables live in SMEM (scalar reads, no per-step re-DMA).
                pl.BlockSpec(memory_space=pltpu.MemorySpace.SMEM),   # (K, C_in)
                pl.BlockSpec(memory_space=pltpu.MemorySpace.SMEM),   # (K,)
                pl.BlockSpec((batch_block, c_in * hw), lambda i: (i, 0)),
            ],
            out_specs=pl.BlockSpec((batch_block, k), lambda i: (i, 0)),
        ),
        compiler_params=pltpu.CompilerParams(
            dimension_semantics=("parallel",),
            vmem_limit_bytes=vmem_limit,
        ),
    )(w_mat, b_vec, x)
    return out[:n]


def _reference(x_nchw, weight, bias, *, r=10.0):
    """Pure-JAX reference matching the PyTorch module."""
    n, c_in, h, w = x_nchw.shape
    k = weight.shape[0]
    out = jnp.einsum(
        "nchw,kc->nkhw",
        x_nchw.astype(jnp.float32),
        weight.reshape(k, c_in).astype(jnp.float32),
    )
    out = out + bias.reshape(1, k, 1, 1)
    m = jnp.max(out, axis=(2, 3), keepdims=True)
    out = (1.0 / r) * jnp.log(
        jnp.mean(jnp.exp(r * (out - m)), axis=(2, 3), keepdims=True)
    ) + m
    return out.reshape(n, k)


if __name__ == "__main__":
    # Module config: in_channels=4, classes=4, support_background=False, r=10.0
    in_channels = 4
    classes = 4
    r = 10.0
    N, H, W = 2, 16, 16

    key = jax.random.PRNGKey(0)
    k_x, k_w, k_b, k_x2 = jax.random.split(key, 4)

    x = jax.random.normal(k_x, (N, in_channels, H, W), dtype=jnp.float32)
    # Deterministic synthetic init for Conv2d(in_channels, classes, kernel_size=1).
    conv_weight = jax.random.normal(k_w, (classes, in_channels, 1, 1), dtype=jnp.float32) * 0.1
    conv_bias = jax.random.normal(k_b, (classes,), dtype=jnp.float32) * 0.1

    logits = jax.block_until_ready(logsumexp_pool(x, conv_weight, conv_bias, r=r))
    ref = _reference(x, conv_weight, conv_bias, r=r)
    assert logits.shape == (N, classes), logits.shape
    assert jnp.allclose(logits, ref, atol=1e-4, rtol=1e-4), (logits, ref)

    # Second check: a batch that needs padding and a multi-step (pipelined) grid.
    N2 = 20
    x2 = jax.random.normal(k_x2, (N2, in_channels, H, W), dtype=jnp.float32)
    logits2 = jax.block_until_ready(
        logsumexp_pool(x2, conv_weight, conv_bias, r=r, batch_block=8))
    ref2 = _reference(x2, conv_weight, conv_bias, r=r)
    assert logits2.shape == (N2, classes), logits2.shape
    assert jnp.allclose(logits2, ref2, atol=1e-4, rtol=1e-4), (logits2, ref2)

    print("KERNEL_OK")
</pallas_src>

<mosaic_0001>
module attributes {stable_mosaic.version = 11 : i64} {
  func.func @_lse_pool_kernel(%arg0: i32, %arg1: memref<4x4xf32, #tpu.memory_space<smem>>, %arg2: memref<4xf32, #tpu.memory_space<smem>>, %arg3: memref<8x1024xf32, #tpu.memory_space<vmem>>, %arg4: memref<8x4xf32, #tpu.memory_space<vmem>>) attributes {dimension_semantics = [#tpu.dimension_semantics<parallel>], iteration_bounds = array<i64: 1>, scalar_prefetch = 0 : i64, scratch_operands = 0 : i64, tpu.core_type = #tpu.core_type<tc>, window_params = [{transform_indices = @transform_0, window_bounds = array<i64: 4, 4>}, {transform_indices = @transform_1, window_bounds = array<i64: 4>}, {transform_indices = @transform_2, window_bounds = array<i64: 8, 1024>}, {transform_indices = @transform_3, window_bounds = array<i64: 8, 4>}]} {
    %c0 = arith.constant 0 : index
    %c0_0 = arith.constant 0 : index
    %0 = vector.load %arg3[%c0, %c0_0] : memref<8x1024xf32, #tpu.memory_space<vmem>>, vector<8x256xf32>
    %c0_1 = arith.constant 0 : index
    %c256 = arith.constant 256 : index
    %1 = vector.load %arg3[%c0_1, %c256] : memref<8x1024xf32, #tpu.memory_space<vmem>>, vector<8x256xf32>
    %c0_2 = arith.constant 0 : index
    %c512 = arith.constant 512 : index
    %2 = vector.load %arg3[%c0_2, %c512] : memref<8x1024xf32, #tpu.memory_space<vmem>>, vector<8x256xf32>
    %c0_3 = arith.constant 0 : index
    %c768 = arith.constant 768 : index
    %3 = vector.load %arg3[%c0_3, %c768] : memref<8x1024xf32, #tpu.memory_space<vmem>>, vector<8x256xf32>
    %c0_4 = arith.constant 0 : index
    %c0_5 = arith.constant 0 : index
    %4 = memref.load %arg1[%c0_4, %c0_5] : memref<4x4xf32, #tpu.memory_space<smem>>
    %5 = vector.broadcast %4 : f32 to vector<8x256xf32>
    %6 = arith.mulf %5, %0 : vector<8x256xf32>
    %c0_6 = arith.constant 0 : index
    %c1 = arith.constant 1 : index
    %7 = memref.load %arg1[%c0_6, %c1] : memref<4x4xf32, #tpu.memory_space<smem>>
    %8 = vector.broadcast %7 : f32 to vector<8x256xf32>
    %9 = arith.mulf %8, %1 : vector<8x256xf32>
    %10 = arith.addf %6, %9 : vector<8x256xf32>
    %c0_7 = arith.constant 0 : index
    %c2 = arith.constant 2 : index
    %11 = memref.load %arg1[%c0_7, %c2] : memref<4x4xf32, #tpu.memory_space<smem>>
    %12 = vector.broadcast %11 : f32 to vector<8x256xf32>
    %13 = arith.mulf %12, %2 : vector<8x256xf32>
    %14 = arith.addf %10, %13 : vector<8x256xf32>
    %c0_8 = arith.constant 0 : index
    %c3 = arith.constant 3 : index
    %15 = memref.load %arg1[%c0_8, %c3] : memref<4x4xf32, #tpu.memory_space<smem>>
    %16 = vector.broadcast %15 : f32 to vector<8x256xf32>
    %17 = arith.mulf %16, %3 : vector<8x256xf32>
    %18 = arith.addf %14, %17 : vector<8x256xf32>
    %cst = arith.constant dense<0xFF800000> : vector<8xf32>
    %19 = vector.multi_reduction <maximumf>, %18, %cst [1] : vector<8x256xf32> to vector<8xf32>
    %20 = vector.shape_cast %19 : vector<8xf32> to vector<8x1xf32>
    %21 = vector.broadcast %20 : vector<8x1xf32> to vector<8x256xf32>
    %22 = arith.subf %18, %21 : vector<8x256xf32>
    %23 = math.exp %22 : vector<8x256xf32>
    %cst_9 = arith.constant dense<0.000000e+00> : vector<8xf32>
    %24 = vector.multi_reduction <add>, %23, %cst_9 [1] : vector<8x256xf32> to vector<8xf32>
    %25 = vector.shape_cast %24 : vector<8xf32> to vector<8x1xf32>
    %26 = math.log %25 : vector<8x1xf32>
    %27 = arith.addf %26, %20 : vector<8x1xf32>
    %cst_10 = arith.constant 1.000000e-01 : f32
    %28 = vector.broadcast %cst_10 : f32 to vector<8x1xf32>
    %29 = arith.mulf %27, %28 : vector<8x1xf32>
    %c0_11 = arith.constant 0 : index
    %30 = memref.load %arg2[%c0_11] : memref<4xf32, #tpu.memory_space<smem>>
    %31 = vector.broadcast %30 : f32 to vector<8x1xf32>
    %32 = arith.addf %29, %31 : vector<8x1xf32>
    %c1_12 = arith.constant 1 : index
    %c0_13 = arith.constant 0 : index
    %33 = memref.load %arg1[%c1_12, %c0_13] : memref<4x4xf32, #tpu.memory_space<smem>>
    %34 = vector.broadcast %33 : f32 to vector<8x256xf32>
    %35 = arith.mulf %34, %0 : vector<8x256xf32>
    %c1_14 = arith.constant 1 : index
    %c1_15 = arith.constant 1 : index
    %36 = memref.load %arg1[%c1_14, %c1_15] : memref<4x4xf32, #tpu.memory_space<smem>>
    %37 = vector.broadcast %36 : f32 to vector<8x256xf32>
    %38 = arith.mulf %37, %1 : vector<8x256xf32>
    %39 = arith.addf %35, %38 : vector<8x256xf32>
    %c1_16 = arith.constant 1 : index
    %c2_17 = arith.constant 2 : index
    %40 = memref.load %arg1[%c1_16, %c2_17] : memref<4x4xf32, #tpu.memory_space<smem>>
    %41 = vector.broadcast %40 : f32 to vector<8x256xf32>
    %42 = arith.mulf %41, %2 : vector<8x256xf32>
    %43 = arith.addf %39, %42 : vector<8x256xf32>
    %c1_18 = arith.constant 1 : index
    %c3_19 = arith.constant 3 : index
    %44 = memref.load %arg1[%c1_18, %c3_19] : memref<4x4xf32, #tpu.memory_space<smem>>
    %45 = vector.broadcast %44 : f32 to vector<8x256xf32>
    %46 = arith.mulf %45, %3 : vector<8x256xf32>
    %47 = arith.addf %43, %46 : vector<8x256xf32>
    %cst_20 = arith.constant dense<0xFF800000> : vector<8xf32>
    %48 = vector.multi_reduction <maximumf>, %47, %cst_20 [1] : vector<8x256xf32> to vector<8xf32>
    %49 = vector.shape_cast %48 : vector<8xf32> to vector<8x1xf32>
    %50 = vector.broadcast %49 : vector<8x1xf32> to vector<8x256xf32>
    %51 = arith.subf %47, %50 : vector<8x256xf32>
    %52 = math.exp %51 : vector<8x256xf32>
    %cst_21 = arith.constant dense<0.000000e+00> : vector<8xf32>
    %53 = vector.multi_reduction <add>, %52, %cst_21 [1] : vector<8x256xf32> to vector<8xf32>
    %54 = vector.shape_cast %53 : vector<8xf32> to vector<8x1xf32>
    %55 = math.log %54 : vector<8x1xf32>
    %56 = arith.addf %55, %49 : vector<8x1xf32>
    %cst_22 = arith.constant 1.000000e-01 : f32
    %57 = vector.broadcast %cst_22 : f32 to vector<8x1xf32>
    %58 = arith.mulf %56, %57 : vector<8x1xf32>
    %c1_23 = arith.constant 1 : index
    %59 = memref.load %arg2[%c1_23] : memref<4xf32, #tpu.memory_space<smem>>
    %60 = vector.broadcast %59 : f32 to vector<8x1xf32>
    %61 = arith.addf %58, %60 : vector<8x1xf32>
    %c2_24 = arith.constant 2 : index
    %c0_25 = arith.constant 0 : index
    %62 = memref.load %arg1[%c2_24, %c0_25] : memref<4x4xf32, #tpu.memory_space<smem>>
    %63 = vector.broadcast %62 : f32 to vector<8x256xf32>
    %64 = arith.mulf %63, %0 : vector<8x256xf32>
    %c2_26 = arith.constant 2 : index
    %c1_27 = arith.constant 1 : index
    %65 = memref.load %arg1[%c2_26, %c1_27] : memref<4x4xf32, #tpu.memory_space<smem>>
    %66 = vector.broadcast %65 : f32 to vector<8x256xf32>
    %67 = arith.mulf %66, %1 : vector<8x256xf32>
    %68 = arith.addf %64, %67 : vector<8x256xf32>
    %c2_28 = arith.constant 2 : index
    %c2_29 = arith.constant 2 : index
    %69 = memref.load %arg1[%c2_28, %c2_29] : memref<4x4xf32, #tpu.memory_space<smem>>
    %70 = vector.broadcast %69 : f32 to vector<8x256xf32>
    %71 = arith.mulf %70, %2 : vector<8x256xf32>
    %72 = arith.addf %68, %71 : vector<8x256xf32>
    %c2_30 = arith.constant 2 : index
    %c3_31 = arith.constant 3 : index
    %73 = memref.load %arg1[%c2_30, %c3_31] : memref<4x4xf32, #tpu.memory_space<smem>>
    %74 = vector.broadcast %73 : f32 to vector<8x256xf32>
    %75 = arith.mulf %74, %3 : vector<8x256xf32>
    %76 = arith.addf %72, %75 : vector<8x256xf32>
    %cst_32 = arith.constant dense<0xFF800000> : vector<8xf32>
    %77 = vector.multi_reduction <maximumf>, %76, %cst_32 [1] : vector<8x256xf32> to vector<8xf32>
    %78 = vector.shape_cast %77 : vector<8xf32> to vector<8x1xf32>
    %79 = vector.broadcast %78 : vector<8x1xf32> to vector<8x256xf32>
    %80 = arith.subf %76, %79 : vector<8x256xf32>
    %81 = math.exp %80 : vector<8x256xf32>
    %cst_33 = arith.constant dense<0.000000e+00> : vector<8xf32>
    %82 = vector.multi_reduction <add>, %81, %cst_33 [1] : vector<8x256xf32> to vector<8xf32>
    %83 = vector.shape_cast %82 : vector<8xf32> to vector<8x1xf32>
    %84 = math.log %83 : vector<8x1xf32>
    %85 = arith.addf %84, %78 : vector<8x1xf32>
    %cst_34 = arith.constant 1.000000e-01 : f32
    %86 = vector.broadcast %cst_34 : f32 to vector<8x1xf32>
    %87 = arith.mulf %85, %86 : vector<8x1xf32>
    %c2_35 = arith.constant 2 : index
    %88 = memref.load %arg2[%c2_35] : memref<4xf32, #tpu.memory_space<smem>>
    %89 = vector.broadcast %88 : f32 to vector<8x1xf32>
    %90 = arith.addf %87, %89 : vector<8x1xf32>
    %c3_36 = arith.constant 3 : index
    %c0_37 = arith.constant 0 : index
    %91 = memref.load %arg1[%c3_36, %c0_37] : memref<4x4xf32, #tpu.memory_space<smem>>
    %92 = vector.broadcast %91 : f32 to vector<8x256xf32>
    %93 = arith.mulf %92, %0 : vector<8x256xf32>
    %c3_38 = arith.constant 3 : index
    %c1_39 = arith.constant 1 : index
    %94 = memref.load %arg1[%c3_38, %c1_39] : memref<4x4xf32, #tpu.memory_space<smem>>
    %95 = vector.broadcast %94 : f32 to vector<8x256xf32>
    %96 = arith.mulf %95, %1 : vector<8x256xf32>
    %97 = arith.addf %93, %96 : vector<8x256xf32>
    %c3_40 = arith.constant 3 : index
    %c2_41 = arith.constant 2 : index
    %98 = memref.load %arg1[%c3_40, %c2_41] : memref<4x4xf32, #tpu.memory_space<smem>>
    %99 = vector.broadcast %98 : f32 to vector<8x256xf32>
    %100 = arith.mulf %99, %2 : vector<8x256xf32>
    %101 = arith.addf %97, %100 : vector<8x256xf32>
    %c3_42 = arith.constant 3 : index
    %c3_43 = arith.constant 3 : index
    %102 = memref.load %arg1[%c3_42, %c3_43] : memref<4x4xf32, #tpu.memory_space<smem>>
    %103 = vector.broadcast %102 : f32 to vector<8x256xf32>
    %104 = arith.mulf %103, %3 : vector<8x256xf32>
    %105 = arith.addf %101, %104 : vector<8x256xf32>
    %cst_44 = arith.constant dense<0xFF800000> : vector<8xf32>
    %106 = vector.multi_reduction <maximumf>, %105, %cst_44 [1] : vector<8x256xf32> to vector<8xf32>
    %107 = vector.shape_cast %106 : vector<8xf32> to vector<8x1xf32>
    %108 = vector.broadcast %107 : vector<8x1xf32> to vector<8x256xf32>
    %109 = arith.subf %105, %108 : vector<8x256xf32>
    %110 = math.exp %109 : vector<8x256xf32>
    %cst_45 = arith.constant dense<0.000000e+00> : vector<8xf32>
    %111 = vector.multi_reduction <add>, %110, %cst_45 [1] : vector<8x256xf32> to vector<8xf32>
    %112 = vector.shape_cast %111 : vector<8xf32> to vector<8x1xf32>
    %113 = math.log %112 : vector<8x1xf32>
    %114 = arith.addf %113, %107 : vector<8x1xf32>
    %cst_46 = arith.constant 1.000000e-01 : f32
    %115 = vector.broadcast %cst_46 : f32 to vector<8x1xf32>
    %116 = arith.mulf %114, %115 : vector<8x1xf32>
    %c3_47 = arith.constant 3 : index
    %117 = memref.load %arg2[%c3_47] : memref<4xf32, #tpu.memory_space<smem>>
    %118 = vector.broadcast %117 : f32 to vector<8x1xf32>
    %119 = arith.addf %116, %118 : vector<8x1xf32>
    %120 = tpu.concatenate %32, %61, %90, %119 in 1 : vector<8x1xf32>, vector<8x1xf32>, vector<8x1xf32>, vector<8x1xf32> -> vector<8x4xf32>
    %c0_48 = arith.constant 0 : index
    %c0_49 = arith.constant 0 : index
    %121 = vector.load %arg4[%c0_48, %c0_49] : memref<8x4xf32, #tpu.memory_space<vmem>>, vector<8x4xf32>
    tpu.vector_store %arg4[%c0_48, %c0_49], %120 {strides = array<i32>} : memref<8x4xf32, #tpu.memory_space<vmem>>, vector<8x4xf32>,
    return
  }
  func.func @transform_0(%arg0: i32) -> (i32, i32) {
    %c0_i32 = arith.constant 0 : i32
    %c0_i32_0 = arith.constant 0 : i32
    %c0_i32_1 = arith.constant 0 : i32
    return %c0_i32, %c0_i32_0 : i32, i32
  }
  func.func @transform_1(%arg0: i32) -> i32 {
    %c0_i32 = arith.constant 0 : i32
    %c0_i32_0 = arith.constant 0 : i32
    return %c0_i32 : i32
  }
  func.func @transform_2(%arg0: i32) -> (i32, i32) {
    %c0_i32 = arith.constant 0 : i32
    %c0_i32_0 = arith.constant 0 : i32
    return %arg0, %c0_i32 : i32, i32
  }
  func.func @transform_3(%arg0: i32) -> (i32, i32) {
    %c0_i32 = arith.constant 0 : i32
    %c0_i32_0 = arith.constant 0 : i32
    return %arg0, %c0_i32 : i32, i32
  }
}

</mosaic_0001>

<llo_original>
// kernel: tpu_custom_call.1
$region0: #{tpu_custom_call.1}
  #allocation0 [shape = 'u32[]', space=smem, size = 0x4, offset = 0x4, fixed_abs, tag = 'smem constant byte address 0x4 - core index']
  #allocation1 [shape = 'u32[144,128]{1,0:T(1,128)}', space=vmem, size = 0x12000, scoped, tag = 'internal scratch']
  %s0 = inlined_call_operand.hbm [shape: f32[4,4], index: 0, kind: input, shape index: {}]
  %s1 = inlined_call_operand.vmem [shape: f32[4], index: 1, kind: input, shape index: {}]
  %s2 = inlined_call_operand.hbm [shape: f32[8,1024], index: 2, kind: input, shape index: {}]
  %s3 = inlined_call_operand.vmem [shape: f32[8,4], index: 3, kind: output, shape index: {}]
  %s4 = sld [smem:[#allocation0]]
  $region34: #{tpu_custom_call.1} parent=0
    _
  %s6 = ssub.s32 1, %s4
  %s7 = scalar_select 0, %s6, %s4
  $region1: #{tpu_custom_call.1} parent=0
    #allocation2 [shape = 'u8[2048]{0}', space=smem, size = 0x800, scoped, tag = 'input window, operand 0, single buffered']
    #allocation3 [shape = 's32[1]{0}', space=sflag, size = 0x4, scoped, tag = 'scoped memory for tpu_custom_call.1']
    #allocation4 [shape = 's32[1]{0}', space=sflag, size = 0x4, scoped, tag = 'scoped memory for tpu_custom_call.1']
    #allocation5 [shape = 's32[1]{0}', space=sflag, size = 0x4, scoped, tag = 'scoped memory for tpu_custom_call.1']
    #allocation6 [shape = 'u8[512]{0}', space=smem, size = 0x200, scoped, tag = 'input window, operand 1, single buffered']
    #allocation7 [shape = 'u8[32768]{0}', space=vmem, size = 0x8000, scoped, tag = 'input window, operand 2, single buffered']
    %8 = vsyncpa [#allocation4], 0
    %9 = vsyncpa [#allocation5], 0
    %10 = vsyncpa [#allocation3], 0
    // Predicated region
    $region2: #{tpu_custom_call.1} parent=1 // pred_check
      _
    $region3: #{tpu_custom_call.1} parent=1 // pred_check_branch
      %12 = sbr.rel (0) target = $region5
    $region4: #{tpu_custom_call.1} parent=1 // pred_region
      %s14 = ssub.s32 64, 64
      %15 = vsyncadd [#allocation4], %s14
      %18 = dma.hbm_to_smem %s0, 64, [#allocation2], [#allocation4]
    $region5: #{tpu_custom_call.1} parent=1 // pred_fallthru
      _
    // Predicated region
    $region6: #{tpu_custom_call.1} parent=1 // pred_check
      _
    $region7: #{tpu_custom_call.1} parent=1 // pred_check_branch
      %20 = sbr.rel (0) target = $region9
    $region8: #{tpu_custom_call.1} parent=1 // pred_region
      %s22 = ssub.s32 16, 16
      %23 = vsyncadd [#allocation5], %s22
      %s25 = sshll.u32 %s1, 4
      %s26 = int_to_ptr.vmem [resolvable:$true] %s25
      %28 = dma.vmem_to_smem %s26, 16, [#allocation6], [#allocation5]
    $region9: #{tpu_custom_call.1} parent=1 // pred_fallthru
      _
    // Predicated region
    $region10: #{tpu_custom_call.1} parent=1 // pred_check
      _
    $region11: #{tpu_custom_call.1} parent=1 // pred_check_branch
      %30 = sbr.rel (0) target = $region13
    $region12: #{tpu_custom_call.1} parent=1 // pred_region
      %s32 = ssub.s32 1024, 1024
      %33 = vsyncadd [#allocation3], %s32
      %s35 = sshll.u32 [#allocation7], 4
      %s36 = int_to_ptr.vmem [resolvable:$true] %s35
      %38 = dma.hbm_to_vmem [thread:$0]  %s2, 1024, %s36, [#allocation3]
    $region13: #{tpu_custom_call.1} parent=1 // pred_fallthru
      _
    // Predicated region
    $region14: #{tpu_custom_call.1} parent=1 // pred_check
      _
    $region15: #{tpu_custom_call.1} parent=1 // pred_check_branch
      %40 = sbr.rel (0) target = $region17
    $region16: #{tpu_custom_call.1} parent=1 // pred_region
      %41 = dma.done [#allocation4], 64
    $region17: #{tpu_custom_call.1} parent=1 // pred_fallthru
      _
    // Predicated region
    $region18: #{tpu_custom_call.1} parent=1 // pred_check
      _
    $region19: #{tpu_custom_call.1} parent=1 // pred_check_branch
      %43 = sbr.rel (0) target = $region21
    $region20: #{tpu_custom_call.1} parent=1 // pred_region
      %44 = dma.done [#allocation5], 16
    $region21: #{tpu_custom_call.1} parent=1 // pred_fallthru
      _
    // Predicated region
    $region22: #{tpu_custom_call.1} parent=1 // pred_check
      _
    $region23: #{tpu_custom_call.1} parent=1 // pred_check_branch
      %46 = sbr.rel (0) target = $region25
    $region24: #{tpu_custom_call.1} parent=1 // pred_region
      %47 = dma.done [#allocation3], 1024
    $region25: #{tpu_custom_call.1} parent=1 // pred_fallthru
      _
    %48 = sfence
    %v49 = vld [vmem:[#allocation7] sm:$0xff]
    %v50 = vld [vmem:[#allocation7 + $0x8] sm:$0xff]
    %v51 = vld [vmem:[#allocation7 + $0x10] sm:$0xff]
    %v52 = vld [vmem:[#allocation7 + $0x18] sm:$0xff]
    %v53 = vld [vmem:[#allocation7 + $0x20] sm:$0xff]
    %v54 = vld [vmem:[#allocation7 + $0x28] sm:$0xff]
    %v55 = vld [vmem:[#allocation7 + $0x30] sm:$0xff]
    %v56 = vld [vmem:[#allocation7 + $0x38] sm:$0xff]
    %s57 = sld [smem:[#allocation2]]
    %v58 = vstv %s57
    %v59 = vmul.f32 %v58, %v49
    %v60 = vmul.f32 %v58, %v50
    %s61 = sld [smem:[#allocation2 + $0x1]]
    %v62 = vstv %s61
    %v63 = vmul.f32 %v62, %v51
    %v64 = vmul.f32 %v62, %v52
    %v65 = vadd.f32 %v59, %v63
    %v66 = vadd.f32 %v60, %v64
    %s67 = sld [smem:[#allocation2 + $0x2]]
    %v68 = vstv %s67
    %v69 = vmul.f32 %v68, %v53
    %v70 = vmul.f32 %v68, %v54
    %v71 = vadd.f32 %v65, %v69
    %v72 = vadd.f32 %v66, %v70
    %s73 = sld [smem:[#allocation2 + $0x3]]
    %v74 = vstv %s73
    %v75 = vmul.f32 %v74, %v55
    %v76 = vmul.f32 %v74, %v56
    %v77 = vadd.f32 %v71, %v75
    %v78 = vadd.f32 %v72, %v76
    %v79 = vmax.f32 %v77, %v78
    %80 = vmax.xlane.f32.xlu0 %v79
    %v81 = vpop.xlane.xlu0 %80
    %v82 = vsub.f32 %v77, %v81
    %v83 = vsub.f32 %v78, %v81
    %v84 = vmul.f32 %v82, 1.442695
    %v85 = vpow.pop %v84
    %v86 = vmul.f32 %v83, 1.442695
    %v87 = vpow.pop %v86
    %v88 = vadd.f32 %v85, %v87
    %89 = vadd.xlane.f32.xlu0 %v88
    %v90 = vpop.xlane.xlu0 %89
    %v91 = vlog2.pop %v90
    %v92 = vmul.f32 %v91, 0.6931472
    %v93 = vadd.f32 %v92, %v81
    %v94 = vmul.f32 %v93, 0.1
    %s95 = sld [smem:[#allocation6]]
    %v96 = vstv %s95
    %v97 = vadd.f32 %v94, %v96
    %s98 = sld [smem:[#allocation2 + $0x80]]
    %v99 = vstv %s98
    %v100 = vmul.f32 %v99, %v49
    %v101 = vmul.f32 %v99, %v50
    %s102 = sld [smem:[#allocation2 + $0x81]]
    %v103 = vstv %s102
    %v104 = vmul.f32 %v103, %v51
    %v105 = vmul.f32 %v103, %v52
    %v106 = vadd.f32 %v100, %v104
    %v107 = vadd.f32 %v101, %v105
    %s108 = sld [smem:[#allocation2 + $0x82]]
    %v109 = vstv %s108
    %v110 = vmul.f32 %v109, %v53
    %v111 = vmul.f32 %v109, %v54
    %v112 = vadd.f32 %v106, %v110
    %v113 = vadd.f32 %v107, %v111
    %s114 = sld [smem:[#allocation2 + $0x83]]
    %v115 = vstv %s114
    %v116 = vmul.f32 %v115, %v55
    %v117 = vmul.f32 %v115, %v56
    %v118 = vadd.f32 %v112, %v116
    %v119 = vadd.f32 %v113, %v117
    %v120 = vmax.f32 %v118, %v119
    %121 = vmax.xlane.f32.xlu0 %v120
    %v122 = vpop.xlane.xlu0 %121
    %v123 = vsub.f32 %v118, %v122
    %v124 = vsub.f32 %v119, %v122
    %v125 = vmul.f32 %v123, 1.442695
    %v126 = vpow.pop %v125
    %v127 = vmul.f32 %v124, 1.442695
    %v128 = vpow.pop %v127
    %v129 = vadd.f32 %v126, %v128
    %130 = vadd.xlane.f32.xlu0 %v129
    %v131 = vpop.xlane.xlu0 %130
    %v132 = vlog2.pop %v131
    %v133 = vmul.f32 %v132, 0.6931472
    %v134 = vadd.f32 %v133, %v122
    %v135 = vmul.f32 %v134, 0.1
    %s136 = sld [smem:[#allocation6 + $0x1]]
    %v137 = vstv %s136
    %v138 = vadd.f32 %v135, %v137
    %s139 = sld [smem:[#allocation2 + $0x100]]
    %v140 = vstv %s139
    %v141 = vmul.f32 %v140, %v49
    %v142 = vmul.f32 %v140, %v50
    %s143 = sld [smem:[#allocation2 + $0x101]]
    %v144 = vstv %s143
    %v145 = vmul.f32 %v144, %v51
    %v146 = vmul.f32 %v144, %v52
    %v147 = vadd.f32 %v141, %v145
    %v148 = vadd.f32 %v142, %v146
    %s149 = sld [smem:[#allocation2 + $0x102]]
    %v150 = vstv %s149
    %v151 = vmul.f32 %v150, %v53
    %v152 = vmul.f32 %v150, %v54
    %v153 = vadd.f32 %v147, %v151
    %v154 = vadd.f32 %v148, %v152
    %s155 = sld [smem:[#allocation2 + $0x103]]
    %v156 = vstv %s155
    %v157 = vmul.f32 %v156, %v55
    %v158 = vmul.f32 %v156, %v56
    %v159 = vadd.f32 %v153, %v157
    %v160 = vadd.f32 %v154, %v158
    %v161 = vmax.f32 %v159, %v160
    %162 = vmax.xlane.f32.xlu0 %v161
    %v163 = vpop.xlane.xlu0 %162
    %v164 = vsub.f32 %v159, %v163
    %v165 = vsub.f32 %v160, %v163
    %v166 = vmul.f32 %v164, 1.442695
    %v167 = vpow.pop %v166
    %v168 = vmul.f32 %v165, 1.442695
    %v169 = vpow.pop %v168
    %v170 = vadd.f32 %v167, %v169
    %171 = vadd.xlane.f32.xlu0 %v170
    %v172 = vpop.xlane.xlu0 %171
    %v173 = vlog2.pop %v172
    %v174 = vmul.f32 %v173, 0.6931472
    %v175 = vadd.f32 %v174, %v163
    %v176 = vmul.f32 %v175, 0.1
    %s177 = sld [smem:[#allocation6 + $0x2]]
    %v178 = vstv %s177
    %v179 = vadd.f32 %v176, %v178
    %s180 = sld [smem:[#allocation2 + $0x180]]
    %v181 = vstv %s180
    %v182 = vmul.f32 %v181, %v49
    %v183 = vmul.f32 %v181, %v50
    %s184 = sld [smem:[#allocation2 + $0x181]]
    %v185 = vstv %s184
    %v186 = vmul.f32 %v185, %v51
    %v187 = vmul.f32 %v185, %v52
    %v188 = vadd.f32 %v182, %v186
    %v189 = vadd.f32 %v183, %v187
    %s190 = sld [smem:[#allocation2 + $0x182]]
    %v191 = vstv %s190
    %v192 = vmul.f32 %v191, %v53
    %v193 = vmul.f32 %v191, %v54
    %v194 = vadd.f32 %v188, %v192
    %v195 = vadd.f32 %v189, %v193
    %s196 = sld [smem:[#allocation2 + $0x183]]
    %v197 = vstv %s196
    %v198 = vmul.f32 %v197, %v55
    %v199 = vmul.f32 %v197, %v56
    %v200 = vadd.f32 %v194, %v198
    %v201 = vadd.f32 %v195, %v199
    %v202 = vmax.f32 %v200, %v201
    %203 = vmax.xlane.f32.xlu0 %v202
    %v204 = vpop.xlane.xlu0 %203
    %v205 = vsub.f32 %v200, %v204
    %v206 = vsub.f32 %v201, %v204
    %v207 = vmul.f32 %v205, 1.442695
    %v208 = vpow.pop %v207
    %v209 = vmul.f32 %v206, 1.442695
    %v210 = vpow.pop %v209
    %v211 = vadd.f32 %v208, %v210
    %212 = vadd.xlane.f32.xlu0 %v211
    %v213 = vpop.xlane.xlu0 %212
    %v214 = vlog2.pop %v213
    %v215 = vmul.f32 %v214, 0.6931472
    %v216 = vadd.f32 %v215, %v204
    %v217 = vmul.f32 %v216, 0.1
    %s218 = sld [smem:[#allocation6 + $0x3]]
    %v219 = vstv %s218
    %v220 = vadd.f32 %v217, %v219
    %vm221 = vcmask 7168
    %v222 = vsel %vm221, %v97, %v138
    %vm223 = vcmask 15360
    %v224 = vsel %vm223, %v222, %v179
    %vm225 = vcmask 23552
    %v226 = vsel %vm225, %v224, %v220
    %vm227 = vcmask 31744
    %228 = vst.msk [vmem:[%s3] sm:$0xff] %vm227, %v226
    // Predicated region
    $region26: #{tpu_custom_call.1} parent=1 // pred_check
      _
    $region27: #{tpu_custom_call.1} parent=1 // pred_check_branch
      %230 = sbr.rel (0) target = $region29
    $region28: #{tpu_custom_call.1} parent=1 // pred_region
      _
    $region29: #{tpu_custom_call.1} parent=1 // pred_fallthru
      _
    // Predicated region
    $region30: #{tpu_custom_call.1} parent=1 // pred_check
      _
    $region31: #{tpu_custom_call.1} parent=1 // pred_check_branch
      %232 = sbr.rel (0) target = $region33
    $region32: #{tpu_custom_call.1} parent=1 // pred_region
      _
    $region33: #{tpu_custom_call.1} parent=1 // pred_fallthru
      _
    %233 = vsyncpa [#allocation3], 1
    %234 = vsyncpa [#allocation4], 1
    %235 = vsyncpa [#allocation5], 1

</llo_original>
